<compile_context>
chip_gen: v7x
topology: tpu7x:2x2x1
jax: 0.10.0
libtpu: 0.0.40
codegen_flags: <defaults>
</compile_context>

<pallas_src>
import jax
import jax.numpy as jnp
from jax.experimental import pallas as pl
from jax.experimental.pallas import tpu as pltpu


def _cdiv(a, b):
    return (a + b - 1) // b


def _round_up(a, b):
    return _cdiv(a, b) * b


def _adarank_kernel(pred_ref, gt_ref, w_ref, out_ref, acc_ref):
    """One (block_rows, cols) tile of weights * relu(1 - (gt - pred)).

    Grid = (chunk [parallel], inner reduction step [arbitrary]).
    acc_ref: (8, cols) f32 VMEM partial-sum accumulator, resident across the
    inner axis.  The final cross-lane/sublane reduce happens in the wrapper on
    the tiny (num_chunks, 8, cols) output.
    """
    inner = pl.program_id(1)

    @pl.when(inner == 0)
    def _():
        acc_ref[...] = jnp.zeros_like(acc_ref)

    # Read tiles in their native dtype (no wrapper-side upcast); compute in f32.
    pred = pred_ref[...].astype(jnp.float32)
    gt = gt_ref[...].astype(jnp.float32)
    w = w_ref[...].astype(jnp.float32)

    term = w * jnp.maximum(1.0 - (gt - pred), 0.0)

    # Fold rows in groups of 8 sublanes: pure elementwise VPU adds into the
    # (8, cols) accumulator -- no per-step XLU (cross-lane) reduction.
    br, c = term.shape
    acc_ref[...] += term.reshape(br // 8, 8, c).sum(axis=0)

    @pl.when(inner == pl.num_programs(1) - 1)
    def _():
        out_ref[...] = acc_ref[...].reshape(1, 8, c)


def adarank_loss(predicted_scores, ground_truth_labels, weights, *,
                 target_tile_bytes=2 * 1024 * 1024, max_parallel_chunks=2):
    """Pallas implementation of AdaRankLoss.forward. Returns a scalar float32."""
    assert predicted_scores.shape == ground_truth_labels.shape == weights.shape

    # Flatten any rank to [lists (rows), documents (cols)] -- the loss is a
    # pure elementwise + full reduction, so layout only needs to be lane-dense.
    if predicted_scores.ndim == 0:
        predicted_scores = predicted_scores.reshape(1, 1)
        ground_truth_labels = ground_truth_labels.reshape(1, 1)
        weights = weights.reshape(1, 1)
    elif predicted_scores.ndim == 1:
        predicted_scores = predicted_scores.reshape(1, -1)
        ground_truth_labels = ground_truth_labels.reshape(1, -1)
        weights = weights.reshape(1, -1)
    elif predicted_scores.ndim > 2:
        cols_last = predicted_scores.shape[-1]
        predicted_scores = predicted_scores.reshape(-1, cols_last)
        ground_truth_labels = ground_truth_labels.reshape(-1, cols_last)
        weights = weights.reshape(-1, cols_last)

    rows, cols = predicted_scores.shape

    arrays = (predicted_scores, ground_truth_labels, weights)
    itemsizes = [jnp.dtype(a.dtype).itemsize for a in arrays]
    min_itemsize = min(itemsizes)

    # Sublane alignment for the row (second-to-last) block dim:
    # 8 rows for 4-byte dtypes, 16 for bf16/fp16, 32 for 1-byte dtypes.
    row_align = max(8, (8 * 4) // min_itemsize)

    # Largest row tile that keeps each (widest-dtype) input tile near the
    # target bytes, but never larger than the data itself.
    bytes_per_row = cols * max(itemsizes)
    block_rows_target = max(
        row_align, (target_tile_bytes // max(1, bytes_per_row)) // row_align * row_align
    )

    # Chunk axis ("parallel") only kicks in once there is more than one target
    # tile of work; on v7x it lets the two TensorCores each stream half the data.
    num_chunks = max(1, min(max_parallel_chunks, _cdiv(rows, block_rows_target)))
    rows_per_chunk = _cdiv(rows, num_chunks)
    inner_steps = max(1, _cdiv(rows_per_chunk, block_rows_target))
    block_rows = _round_up(_cdiv(rows_per_chunk, inner_steps), row_align)
    rows_padded = num_chunks * inner_steps * block_rows

    pad = rows_padded - rows
    if pad:
        # Zero-padded weights => padded rows contribute exactly 0 to the loss.
        predicted_scores = jnp.pad(predicted_scores, ((0, pad), (0, 0)))
        ground_truth_labels = jnp.pad(ground_truth_labels, ((0, pad), (0, 0)))
        weights = jnp.pad(weights, ((0, pad), (0, 0)))

    grid = (num_chunks, inner_steps)
    in_spec = pl.BlockSpec((block_rows, cols), lambda c, i: (c * inner_steps + i, 0))
    # Lane-dense per-chunk partial output; resident across the inner axis.
    out_spec = pl.BlockSpec((1, 8, cols), lambda c, i: (c, 0, 0))

    # Explicit VMEM budget: 3 input streams x 2 pipeline buffers x tile bytes,
    # plus the accumulator / output blocks, with margin.  Kept well under the
    # 64 MiB VMEM of a v7x TensorCore.
    tile_in_bytes = block_rows * cols * sum(itemsizes)          # 1 buffer, all inputs
    working_set = 2 * tile_in_bytes + 4 * (8 * cols * 4)        # + acc/out blocks
    vmem_limit_bytes = int(min(max(2 * working_set, 32 * 1024 * 1024),
                               56 * 1024 * 1024))

    partials = pl.pallas_call(
        _adarank_kernel,
        out_shape=jax.ShapeDtypeStruct((num_chunks, 8, cols), jnp.float32),
        grid_spec=pltpu.PrefetchScalarGridSpec(
            num_scalar_prefetch=0,
            grid=grid,
            in_specs=[in_spec, in_spec, in_spec],
            out_specs=out_spec,
            scratch_shapes=[pltpu.VMEM((8, cols), jnp.float32)],
        ),
        compiler_params=pltpu.CompilerParams(
            dimension_semantics=("parallel", "arbitrary"),
            vmem_limit_bytes=vmem_limit_bytes,
        ),
    )(predicted_scores, ground_truth_labels, weights)

    # Tiny final reduce (chunks x 8 x cols) done outside the kernel.
    return jnp.sum(partials)


def _reference(pred, gt, w):
    return jnp.sum(
        w.astype(jnp.float32)
        * jnp.maximum(1.0 - (gt.astype(jnp.float32) - pred.astype(jnp.float32)), 0.0)
    )


if __name__ == "__main__":
    key = jax.random.PRNGKey(0)
    k1, k2, k3 = jax.random.split(key, 3)

    # Small shapes: 16 lists x 128 documents each.
    rows, cols = 16, 128
    predicted_scores = jax.random.normal(k1, (rows, cols), dtype=jnp.float32)
    ground_truth_labels = jax.random.randint(k2, (rows, cols), 0, 3).astype(jnp.float32)
    weights = jax.random.uniform(k3, (rows, cols), dtype=jnp.float32)

    loss = adarank_loss(predicted_scores, ground_truth_labels, weights)
    loss = jax.block_until_ready(loss)
    ref = _reference(predicted_scores, ground_truth_labels, weights)
    assert jnp.allclose(loss, ref, rtol=1e-5, atol=1e-5), (loss, ref)

    # Secondary check: ragged row count (exercises the zero-padding path).
    r2 = 20
    p2 = jax.random.normal(k1, (r2, cols), dtype=jnp.float32)
    g2 = jax.random.randint(k2, (r2, cols), 0, 3).astype(jnp.float32)
    w2 = jax.random.uniform(k3, (r2, cols), dtype=jnp.float32)
    loss2 = jax.block_until_ready(adarank_loss(p2, g2, w2))
    assert jnp.allclose(loss2, _reference(p2, g2, w2), rtol=1e-5, atol=1e-5)

    # Tertiary check: bf16 inputs streamed in native dtype (cast in-kernel).
    p3 = predicted_scores.astype(jnp.bfloat16)
    g3 = ground_truth_labels.astype(jnp.bfloat16)
    w3 = weights.astype(jnp.bfloat16)
    loss3 = jax.block_until_ready(adarank_loss(p3, g3, w3))
    assert jnp.allclose(loss3, _reference(p3, g3, w3), rtol=1e-2, atol=1e-2)

    print("KERNEL_OK")
</pallas_src>

<mosaic_0001>
module attributes {stable_mosaic.version = 11 : i64} {
  func.func @_adarank_kernel(%arg0: i32, %arg1: i32, %arg2: memref<16x128xf32, #tpu.memory_space<vmem>>, %arg3: memref<16x128xf32, #tpu.memory_space<vmem>>, %arg4: memref<16x128xf32, #tpu.memory_space<vmem>>, %arg5: memref<1x8x128xf32, #tpu.memory_space<vmem>>, %arg6: memref<8x128xf32, #tpu.memory_space<vmem>>) attributes {dimension_semantics = [#tpu.dimension_semantics<parallel>, #tpu.dimension_semantics<arbitrary>], iteration_bounds = array<i64: 1, 1>, scalar_prefetch = 0 : i64, scratch_operands = 1 : i64, tpu.core_type = #tpu.core_type<tc>, window_params = [{transform_indices = @transform_0, window_bounds = array<i64: 16, 128>}, {transform_indices = @transform_1, window_bounds = array<i64: 16, 128>}, {transform_indices = @transform_2, window_bounds = array<i64: 16, 128>}, {transform_indices = @transform_3, window_bounds = array<i64: 1, 8, 128>}]} {
    %c0_i32 = arith.constant 0 : i32
    %0 = arith.cmpi eq, %arg1, %c0_i32 : i32
    %1 = arith.extui %0 : i1 to i32
    %c0_i32_0 = arith.constant 0 : i32
    %2 = arith.cmpi ne, %1, %c0_i32_0 : i32
    scf.if %2 {
      %cst_14 = arith.constant 0.000000e+00 : f32
      %20 = vector.broadcast %cst_14 : f32 to vector<8x128xf32>
      %c0_15 = arith.constant 0 : index
      %c0_16 = arith.constant 0 : index
      %21 = vector.load %arg6[%c0_15, %c0_16] : memref<8x128xf32, #tpu.memory_space<vmem>>, vector<8x128xf32>
      tpu.vector_store %arg6[%c0_15, %c0_16], %20 {strides = array<i32>} : memref<8x128xf32, #tpu.memory_space<vmem>>, vector<8x128xf32>,
    } else {
    }
    %c0 = arith.constant 0 : index
    %c0_1 = arith.constant 0 : index
    %3 = vector.load %arg2[%c0, %c0_1] : memref<16x128xf32, #tpu.memory_space<vmem>>, vector<16x128xf32>
    %c0_2 = arith.constant 0 : index
    %c0_3 = arith.constant 0 : index
    %4 = vector.load %arg3[%c0_2, %c0_3] : memref<16x128xf32, #tpu.memory_space<vmem>>, vector<16x128xf32>
    %c0_4 = arith.constant 0 : index
    %c0_5 = arith.constant 0 : index
    %5 = vector.load %arg4[%c0_4, %c0_5] : memref<16x128xf32, #tpu.memory_space<vmem>>, vector<16x128xf32>
    %6 = arith.subf %4, %3 : vector<16x128xf32>
    %cst = arith.constant 1.000000e+00 : f32
    %7 = vector.broadcast %cst : f32 to vector<16x128xf32>
    %8 = arith.subf %7, %6 : vector<16x128xf32>
    %cst_6 = arith.constant 0.000000e+00 : f32
    %9 = vector.broadcast %cst_6 : f32 to vector<16x128xf32>
    %10 = arith.maximumf %8, %9 : vector<16x128xf32>
    %11 = arith.mulf %5, %10 : vector<16x128xf32>
    %c0_7 = arith.constant 0 : index
    %c0_8 = arith.constant 0 : index
    %12 = vector.load %arg6[%c0_7, %c0_8] : memref<8x128xf32, #tpu.memory_space<vmem>>, vector<8x128xf32>
    %13 = vector.shape_cast %11 : vector<16x128xf32> to vector<2x8x128xf32>
    %cst_9 = arith.constant dense<0.000000e+00> : vector<8x128xf32>
    %14 = vector.multi_reduction <add>, %13, %cst_9 [0] : vector<2x8x128xf32> to vector<8x128xf32>
    %15 = arith.addf %12, %14 : vector<8x128xf32>
    %c0_10 = arith.constant 0 : index
    %c0_11 = arith.constant 0 : index
    %16 = vector.load %arg6[%c0_10, %c0_11] : memref<8x128xf32, #tpu.memory_space<vmem>>, vector<8x128xf32>
    tpu.vector_store %arg6[%c0_10, %c0_11], %15 {strides = array<i32>} : memref<8x128xf32, #tpu.memory_space<vmem>>, vector<8x128xf32>,
    %c0_i32_12 = arith.constant 0 : i32
    %17 = arith.cmpi eq, %arg1, %c0_i32_12 : i32
    %18 = arith.extui %17 : i1 to i32
    %c0_i32_13 = arith.constant 0 : i32
    %19 = arith.cmpi ne, %18, %c0_i32_13 : i32
    scf.if %19 {
      %c0_14 = arith.constant 0 : index
      %c0_15 = arith.constant 0 : index
      %20 = vector.load %arg6[%c0_14, %c0_15] : memref<8x128xf32, #tpu.memory_space<vmem>>, vector<8x128xf32>
      %21 = vector.shape_cast %20 : vector<8x128xf32> to vector<1x8x128xf32>
      %c0_16 = arith.constant 0 : index
      %c0_17 = arith.constant 0 : index
      %c0_18 = arith.constant 0 : index
      %22 = vector.load %arg5[%c0_16, %c0_17, %c0_18] : memref<1x8x128xf32, #tpu.memory_space<vmem>>, vector<1x8x128xf32>
      tpu.vector_store %arg5[%c0_16, %c0_17, %c0_18], %21 {strides = array<i32>} : memref<1x8x128xf32, #tpu.memory_space<vmem>>, vector<1x8x128xf32>,
    } else {
    }
    return
  }
  func.func @transform_0(%arg0: i32, %arg1: i32) -> (i32, i32) {
    %c1_i32 = arith.constant 1 : i32
    %0 = arith.muli %arg0, %c1_i32 : i32
    %1 = arith.addi %0, %arg1 : i32
    %c0_i32 = arith.constant 0 : i32
    %c0_i32_0 = arith.constant 0 : i32
    return %1, %c0_i32 : i32, i32
  }
  func.func @transform_1(%arg0: i32, %arg1: i32) -> (i32, i32) {
    %c1_i32 = arith.constant 1 : i32
    %0 = arith.muli %arg0, %c1_i32 : i32
    %1 = arith.addi %0, %arg1 : i32
    %c0_i32 = arith.constant 0 : i32
    %c0_i32_0 = arith.constant 0 : i32
    return %1, %c0_i32 : i32, i32
  }
  func.func @transform_2(%arg0: i32, %arg1: i32) -> (i32, i32) {
    %c1_i32 = arith.constant 1 : i32
    %0 = arith.muli %arg0, %c1_i32 : i32
    %1 = arith.addi %0, %arg1 : i32
    %c0_i32 = arith.constant 0 : i32
    %c0_i32_0 = arith.constant 0 : i32
    return %1, %c0_i32 : i32, i32
  }
  func.func @transform_3(%arg0: i32, %arg1: i32) -> (i32, i32, i32) {
    %c0_i32 = arith.constant 0 : i32
    %c0_i32_0 = arith.constant 0 : i32
    %c0_i32_1 = arith.constant 0 : i32
    return %arg0, %c0_i32, %c0_i32_0 : i32, i32, i32
  }
}

</mosaic_0001>

<llo_original>
// kernel: tpu_custom_call.1
$region0: #{tpu_custom_call.1}
  #allocation0 [shape = 'u32[]', space=smem, size = 0x4, offset = 0x4, fixed_abs, tag = 'smem constant byte address 0x4 - core index']
  #allocation1 [shape = 'u32[144,128]{1,0:T(1,128)}', space=vmem, size = 0x12000, scoped, tag = 'internal scratch']
  #allocation2 [shape = 'f32[8,128]{1,0:T(8,128)}', space=vmem, size = 0x1000, scoped, tag = 'scratch operand']
  %s0 = inlined_call_operand.hbm [shape: f32[16,128], index: 0, kind: input, shape index: {}]
  %s1 = inlined_call_operand.hbm [shape: f32[16,128], index: 1, kind: input, shape index: {}]
  %s2 = inlined_call_operand.hbm [shape: f32[16,128], index: 2, kind: input, shape index: {}]
  %s3 = inlined_call_operand.hbm [shape: f32[1,8,128], index: 3, kind: output, shape index: {}]
  %s4 = sld [smem:[#allocation0]]
  $region42: #{tpu_custom_call.1} parent=0
    _
  %s6 = ssub.s32 1, %s4
  %s7 = scalar_select 0, %s6, %s4
  $region1: #{tpu_custom_call.1} parent=0
    #allocation3 [shape = 'u8[8192]{0}', space=vmem, size = 0x2000, scoped, tag = 'input window, operand 0, single buffered']
    #allocation4 [shape = 's32[1]{0}', space=sflag, size = 0x4, scoped, tag = 'scoped memory for tpu_custom_call.1']
    #allocation5 [shape = 's32[1]{0}', space=sflag, size = 0x4, scoped, tag = 'scoped memory for tpu_custom_call.1']
    #allocation6 [shape = 'u8[8192]{0}', space=vmem, size = 0x2000, scoped, tag = 'input window, operand 1, single buffered']
    #allocation7 [shape = 's32[1]{0}', space=sflag, size = 0x4, scoped, tag = 'scoped memory for tpu_custom_call.1']
    #allocation8 [shape = 'u8[8192]{0}', space=vmem, size = 0x2000, scoped, tag = 'input window, operand 2, single buffered']
    #allocation9 [shape = 'u8[4096]{0}', space=vmem, size = 0x1000, scoped, tag = 'output window, operand 0, single buffered']
    %8 = vsyncpa [#allocation4], 0
    %9 = vsyncpa [#allocation7], 0
    %10 = vsyncpa [#allocation5], 0
    // Predicated region
    $region2: #{tpu_custom_call.1} parent=1 // pred_check
      _
    $region3: #{tpu_custom_call.1} parent=1 // pred_check_branch
      %12 = sbr.rel (0) target = $region5
    $region4: #{tpu_custom_call.1} parent=1 // pred_region
      %s13 = sadd.s32 0, 0
      %s14 = smul.u32 2, %s13
      %s16 = ssub.s32 256, 256
      %17 = vsyncadd [#allocation4], %s16
      %s18 = smul.addr %s14, 128
      %s19 = scalar_lea.hbm %s0, %s18
      %s20 = sshll.u32 [#allocation3], 4
      %s21 = int_to_ptr.vmem [resolvable:$true] %s20
      %26 = dma.hbm_to_vmem [thread:$0]  %s19, 256, %s21, [#allocation4], 128, 128, 8
    $region5: #{tpu_custom_call.1} parent=1 // pred_fallthru
      _
    // Predicated region
    $region6: #{tpu_custom_call.1} parent=1 // pred_check
      _
    $region7: #{tpu_custom_call.1} parent=1 // pred_check_branch
      %28 = sbr.rel (0) target = $region9
    $region8: #{tpu_custom_call.1} parent=1 // pred_region
      %s29 = sadd.s32 0, 0
      %s30 = smul.u32 2, %s29
      %s32 = ssub.s32 256, 256
      %33 = vsyncadd [#allocation7], %s32
      %s34 = smul.addr %s30, 128
      %s35 = scalar_lea.hbm %s1, %s34
      %s36 = sshll.u32 [#allocation6], 4
      %s37 = int_to_ptr.vmem [resolvable:$true] %s36
      %42 = dma.hbm_to_vmem [thread:$0]  %s35, 256, %s37, [#allocation7], 128, 128, 8
    $region9: #{tpu_custom_call.1} parent=1 // pred_fallthru
      _
    // Predicated region
    $region10: #{tpu_custom_call.1} parent=1 // pred_check
      _
    $region11: #{tpu_custom_call.1} parent=1 // pred_check_branch
      %44 = sbr.rel (0) target = $region13
    $region12: #{tpu_custom_call.1} parent=1 // pred_region
      %s45 = sadd.s32 0, 0
      %s46 = smul.u32 2, %s45
      %s48 = ssub.s32 256, 256
      %49 = vsyncadd [#allocation7], %s48
      %s50 = smul.addr %s46, 128
      %s51 = scalar_lea.hbm %s2, %s50
      %s52 = sshll.u32 [#allocation8], 4
      %s53 = int_to_ptr.vmem [resolvable:$true] %s52
      %58 = dma.hbm_to_vmem [thread:$0]  %s51, 256, %s53, [#allocation7], 128, 128, 8
    $region13: #{tpu_custom_call.1} parent=1 // pred_fallthru
      _
    // Predicated region
    $region14: #{tpu_custom_call.1} parent=1 // pred_check
      _
    $region15: #{tpu_custom_call.1} parent=1 // pred_check_branch
      %60 = sbr.rel (0) target = $region17
    $region16: #{tpu_custom_call.1} parent=1 // pred_region
      %61 = dma.done [#allocation4], 256
    $region17: #{tpu_custom_call.1} parent=1 // pred_fallthru
      _
    // Predicated region
    $region18: #{tpu_custom_call.1} parent=1 // pred_check
      _
    $region19: #{tpu_custom_call.1} parent=1 // pred_check_branch
      %63 = sbr.rel (0) target = $region21
    $region20: #{tpu_custom_call.1} parent=1 // pred_region
      %64 = dma.done [#allocation7], 256
    $region21: #{tpu_custom_call.1} parent=1 // pred_fallthru
      _
    // Predicated region
    $region22: #{tpu_custom_call.1} parent=1 // pred_check
      _
    $region23: #{tpu_custom_call.1} parent=1 // pred_check_branch
      %66 = sbr.rel (0) target = $region25
    $region24: #{tpu_custom_call.1} parent=1 // pred_region
      %67 = dma.done [#allocation7], 256
    $region25: #{tpu_custom_call.1} parent=1 // pred_fallthru
      _
    %s68 = sadd.s32 0, 0
    %s69 = smul.u32 2, %s68
    %s70 = sadd.s32 0, 0
    %s71 = smul.u32 2, %s70
    %s72 = sadd.s32 0, 0
    %s73 = smul.u32 2, %s72
    %p74 = scmp.eq.s32.totalorder 0, 0
    // Predicated region
    $region26: #{tpu_custom_call.1} parent=1 // pred_check
      %p75 = pneg %p74
    $region27: #{tpu_custom_call.1} parent=1 // pred_check_branch
      %77 = sbr.rel (%p75) target = $region29
    $region28: #{tpu_custom_call.1} parent=1 // pred_region
      %78 = vst [vmem:[#allocation2] sm:$0xff] 0.0
    $region29: #{tpu_custom_call.1} parent=1 // pred_fallthru
      _
    %v79 = vld [vmem:[#allocation3] sm:$0xff]
    %v80 = vld [vmem:[#allocation3 + $0x8] sm:$0xff]
    %v81 = vld [vmem:[#allocation6] sm:$0xff]
    %v82 = vld [vmem:[#allocation6 + $0x8] sm:$0xff]
    %v83 = vld [vmem:[#allocation8] sm:$0xff]
    %v84 = vld [vmem:[#allocation8 + $0x8] sm:$0xff]
    %v85 = vsub.f32 %v81, %v79
    %v86 = vsub.f32 %v82, %v80
    %v87 = vsub.f32 1.0, %v85
    %v88 = vsub.f32 1.0, %v86
    %v89 = vmax.f32 %v87, 0.0
    %v90 = vmax.f32 %v88, 0.0
    %v91 = vmul.f32 %v83, %v89
    %v92 = vmul.f32 %v84, %v90
    %v93 = vld [vmem:[#allocation2] sm:$0xff]
    %v94 = vadd.f32 %v91, %v92
    %v95 = vadd.f32 %v93, %v94
    %96 = vst [vmem:[#allocation2] sm:$0xff] %v95
    // Predicated region
    $region30: #{tpu_custom_call.1} parent=1 // pred_check
      %p97 = pneg %p74
    $region31: #{tpu_custom_call.1} parent=1 // pred_check_branch
      %99 = sbr.rel (%p97) target = $region33
    $region32: #{tpu_custom_call.1} parent=1 // pred_region
      %v100 = vld [vmem:[#allocation2] sm:$0xff]
      %101 = vst [vmem:[#allocation9] sm:$0xff] %v100
    $region33: #{tpu_custom_call.1} parent=1 // pred_fallthru
      _
    // Predicated region
    $region34: #{tpu_custom_call.1} parent=1 // pred_check
      _
    $region35: #{tpu_custom_call.1} parent=1 // pred_check_branch
      %103 = sbr.rel (0) target = $region37
    $region36: #{tpu_custom_call.1} parent=1 // pred_region
      %s105 = ssub.s32 128, 128
      %106 = vsyncadd [#allocation5], %s105
      %s108 = sshll.u32 [#allocation9], 4
      %s109 = int_to_ptr.vmem [resolvable:$true] %s108
      %111 = dma.vmem_to_hbm [thread:$0]  %s109, 128, %s3, [#allocation5]
    $region37: #{tpu_custom_call.1} parent=1 // pred_fallthru
      _
    // Predicated region
    $region38: #{tpu_custom_call.1} parent=1 // pred_check
      _
    $region39: #{tpu_custom_call.1} parent=1 // pred_check_branch
      %113 = sbr.rel (0) target = $region41
    $region40: #{tpu_custom_call.1} parent=1 // pred_region
      %114 = dma.done [#allocation5], 128
    $region41: #{tpu_custom_call.1} parent=1 // pred_fallthru
      _
    %115 = vsyncpa [#allocation4], 1
    %116 = vsyncpa [#allocation7], 1
    %117 = vsyncpa [#allocation5], 1

</llo_original>
